<compile_context>
chip_gen: v5e
topology: v5e:2x2
jax: 0.10.0
libtpu: 0.0.40
codegen_flags: <defaults>
</compile_context>

<pallas_src>
import jax
import jax.numpy as jnp
from jax.experimental import pallas as pl
from jax.experimental.pallas import tpu as pltpu


# ---------------------------------------------------------------------------
# Fused kernel: CBAM -> +value -> LN1 -> FFN(tanh) -> +x -> LN2
# ---------------------------------------------------------------------------
def _fused_kernel(x_ref, w1_ref, w2_ref, sa_ref, ln_ref, wf1_ref, bf1_ref,
                  wf2_ref, o_ref):
    # x_ref : (Bc, S, E) value block, natural (seq, embed) layout
    # w1_ref: (E_r, E)   SE conv1 (no bias), columns in group-major channel order
    # w2_ref: (E, E_r)   SE conv2 (no bias), rows    in group-major channel order
    # sa_ref: (3,) SMEM  [w_sa_max, w_sa_mean, b_sa]
    # ln_ref: (5, E)     packed [gamma1, beta1, gamma2, beta2, b_ff2]
    Bc, S, E = x_ref.shape
    r = E // S                       # CBAM channel (s*r + k) == row s of lane-chunk k
    eps = 1e-5

    w1 = w1_ref[...]
    w2 = w2_ref[...]

    # ---- CBAM channel-attention pools (per batch, per lane-chunk) -----------
    v_chunks = []                    # v_chunks[b][k]: (S, S)
    p_cols = []                      # per batch: (E, 2) [max, avg] pools, group-major order
    for b in range(Bc):
        x_se = x_ref[b]                                           # (S, E)
        chunks = [x_se[:, k * S:(k + 1) * S] for k in range(r)]   # (S, S) each
        v_chunks.append(chunks)
        maxp = jnp.concatenate(
            [jnp.max(c, axis=1, keepdims=True) for c in chunks], axis=0)   # (E, 1)
        avgp = jnp.concatenate(
            [jnp.mean(c, axis=1, keepdims=True) for c in chunks], axis=0)  # (E, 1)
        p_cols.append(jnp.concatenate([maxp, avgp], axis=1))               # (E, 2)
    P = jnp.concatenate(p_cols, axis=1)                                    # (E, 2*Bc)

    # ---- shared SE MLP: ONE matmul chain for {max, avg} x batch -------------
    h = jnp.maximum(jnp.dot(w1, P, preferred_element_type=jnp.float32), 0.0)  # (E_r, 2Bc)
    se_out = jnp.dot(w2, h, preferred_element_type=jnp.float32)               # (E, 2Bc)

    wsa_max = sa_ref[0]
    wsa_avg = sa_ref[1]
    bsa = sa_ref[2]

    g1 = ln_ref[0:1, :]
    b1 = ln_ref[1:2, :]
    g2 = ln_ref[2:3, :]
    b2 = ln_ref[3:4, :]
    bf2 = ln_ref[4:5, :]

    def layer_norm(v, g, bb):
        mu = jnp.mean(v, axis=-1, keepdims=True)
        var = jnp.mean((v - mu) ** 2, axis=-1, keepdims=True)
        return (v - mu) * jax.lax.rsqrt(var + eps) * g + bb

    # ---- CBAM finish + both residuals, assembled directly in (S, E) layout --
    y_rows = []
    for b in range(Bc):
        ca = jax.nn.sigmoid(se_out[:, 2 * b:2 * b + 1]
                            + se_out[:, 2 * b + 1:2 * b + 2])      # (E, 1) group-major
        chunks = v_chunks[b]
        out1 = [chunks[k] * ca[k * S:(k + 1) * S, :] for k in range(r)]   # (S, S) each

        # spatial attention: max / mean over channels == over (chunk, row)
        max_c = out1[0].max(axis=0, keepdims=True)                 # (1, S)
        sum_c = out1[0].sum(axis=0, keepdims=True)
        for k in range(1, r):
            max_c = jnp.maximum(max_c, out1[k].max(axis=0, keepdims=True))
            sum_c = sum_c + out1[k].sum(axis=0, keepdims=True)
        mean_c = sum_c * (1.0 / E)
        sa = jax.nn.sigmoid(wsa_max * max_c + wsa_avg * mean_c + bsa)   # (1, S)

        # (attn + value) chunk k = out1_k * sa + 2 * v_k  (CBAM residual + skip)
        y_rows.append(jnp.concatenate(
            [out1[k] * sa + 2.0 * chunks[k] for k in range(r)], axis=1))  # (S, E)
    Y = jnp.concatenate(y_rows, axis=0)                                   # (Bc*S, E)

    # ---- norm1 -> FFN(tanh) -> norm2, batch-folded matmuls (M = Bc*S) -------
    X = layer_norm(Y, g1, b1)
    Hh = jnp.tanh(jnp.dot(X, wf1_ref[...],
                          preferred_element_type=jnp.float32) + bf1_ref[...])
    F = jnp.dot(Hh, wf2_ref[...], preferred_element_type=jnp.float32) + bf2
    OUT = layer_norm(F + X, g2, b2)                                       # (Bc*S, E)

    for b in range(Bc):
        o_ref[b] = OUT[b * S:(b + 1) * S, :]


# ---------------------------------------------------------------------------
# Wrapper
# ---------------------------------------------------------------------------
def transformer_block_wai(value, params):
    """value: (B, S, E) float32.  key/query/mask are unused by the torch module."""
    B, S, E = value.shape
    assert E % S == 0, "kernel assumes embed_size % seq_len == 0"  # TODO(synk): general E/S ratios
    r = E // S
    E_r = params["w_ca1"].shape[0]
    H = params["w_ff1"].shape[1]

    # 2-way batch split: uses both v7x TensorCores; only 2 short steps on v5e/v6e.
    NC = 2 if (B >= 2 and B % 2 == 0) else 1
    Bc = B // NC

    # Pre-permute the SE weights to group-major channel order (channel s*r+k
    # -> position k*S+s), done once in plain JAX so the kernel never reshapes
    # or transposes activations.
    gm = jnp.arange(E).reshape(S, r).T.reshape(E)
    w1_gm = params["w_ca1"][:, gm]                   # (E_r, E)
    w2_gm = params["w_ca2"][gm, :]                   # (E, E_r)

    # tiny spatial-attention conv params -> SMEM scalars
    sa_pack = jnp.concatenate(
        [params["w_sa"].reshape(-1), params["b_sa"].reshape(-1)]
    ).astype(jnp.float32)                            # (3,)
    # pack all five (1, E) params into a single block
    ln_pack = jnp.concatenate(
        [params["g1"], params["b1"], params["g2"], params["b2"], params["b_ff2"]],
        axis=0)                                      # (5, E)

    return pl.pallas_call(
        _fused_kernel,
        out_shape=jax.ShapeDtypeStruct((B, S, E), jnp.float32),
        grid=(NC,),
        in_specs=[
            pl.BlockSpec((Bc, S, E), lambda n: (n, 0, 0)),
            pl.BlockSpec((E_r, E), lambda n: (0, 0)),
            pl.BlockSpec((E, E_r), lambda n: (0, 0)),
            pl.BlockSpec(memory_space=pltpu.MemorySpace.SMEM),
            pl.BlockSpec((5, E), lambda n: (0, 0)),
            pl.BlockSpec((E, H), lambda n: (0, 0)),
            pl.BlockSpec((1, H), lambda n: (0, 0)),
            pl.BlockSpec((H, E), lambda n: (0, 0)),
        ],
        out_specs=pl.BlockSpec((Bc, S, E), lambda n: (n, 0, 0)),
        compiler_params=pltpu.CompilerParams(dimension_semantics=("parallel",)),
    )(value, w1_gm, w2_gm, sa_pack, ln_pack,
      params["w_ff1"], params["b_ff1"], params["w_ff2"])


# ---------------------------------------------------------------------------
# Pure-JAX reference (mirrors the torch forward) for correctness checking
# ---------------------------------------------------------------------------
def reference(value, params):
    B, S, E = value.shape
    v = value.reshape(B, E, S)                                    # (B, E, S)
    avg_p = jnp.mean(v, axis=2, keepdims=True)                    # (B, E, 1)
    max_p = jnp.max(v, axis=2, keepdims=True)

    def se(p):
        h = jnp.maximum(jnp.einsum("re,bei->bri", params["w_ca1"], p), 0.0)
        return jnp.einsum("er,bri->bei", params["w_ca2"], h)

    ca = jax.nn.sigmoid(se(max_p) + se(avg_p))                    # (B, E, 1)
    out1 = v * ca
    max_c = jnp.max(out1, axis=1, keepdims=True)                  # (B, 1, S)
    mean_c = jnp.mean(out1, axis=1, keepdims=True)
    sa = jax.nn.sigmoid(params["w_sa"][0, 0] * max_c
                        + params["w_sa"][0, 1] * mean_c
                        + params["b_sa"][0, 0])
    cbam = out1 * sa + v
    attn = cbam.reshape(B, S, E)

    def ln(y, g, b):
        mu = jnp.mean(y, axis=-1, keepdims=True)
        var = jnp.mean((y - mu) ** 2, axis=-1, keepdims=True)
        return (y - mu) / jnp.sqrt(var + 1e-5) * g + b

    x = ln(attn + value, params["g1"], params["b1"])
    h = jnp.tanh(x @ params["w_ff1"] + params["b_ff1"])
    f = h @ params["w_ff2"] + params["b_ff2"]
    return ln(f + x, params["g2"], params["b2"])


# ---------------------------------------------------------------------------
if __name__ == "__main__":
    B, S, E = 2, 16, 32          # S must be a perfect square (sqrt(S)=4)
    heads = 4                    # CBAM reduction
    forward_expansion = 4
    E_r = E // heads
    H = forward_expansion * E

    key = jax.random.PRNGKey(0)
    ks = jax.random.split(key, 8)

    params = {
        # CBAM channel-attention SE (1x1 convs, no bias)
        "w_ca1": 0.1 * jax.random.normal(ks[0], (E_r, E), jnp.float32),
        "w_ca2": 0.1 * jax.random.normal(ks[1], (E, E_r), jnp.float32),
        # CBAM spatial-attention 1x1 conv (2 -> 1, with bias)
        "w_sa": 0.1 * jax.random.normal(ks[2], (1, 2), jnp.float32),
        "b_sa": jnp.zeros((1, 1), jnp.float32),
        # LayerNorms
        "g1": jnp.ones((1, E), jnp.float32), "b1": jnp.zeros((1, E), jnp.float32),
        "g2": jnp.ones((1, E), jnp.float32), "b2": jnp.zeros((1, E), jnp.float32),
        # Feed-forward (stored pre-transposed: x @ W + b)
        "w_ff1": 0.1 * jax.random.normal(ks[3], (E, H), jnp.float32),
        "b_ff1": 0.01 * jax.random.normal(ks[4], (1, H), jnp.float32),
        "w_ff2": 0.1 * jax.random.normal(ks[5], (H, E), jnp.float32),
        "b_ff2": 0.01 * jax.random.normal(ks[6], (1, E), jnp.float32),
    }

    value = jax.random.normal(ks[7], (B, S, E), jnp.float32)
    # key / query / mask are accepted but unused by the torch module's forward.

    out = transformer_block_wai(value, params)
    out = jax.block_until_ready(out)

    ref = reference(value, params)
    assert out.shape == (B, S, E)
    assert jnp.allclose(out, ref, atol=1e-4, rtol=1e-4), "mismatch vs reference"

    print("KERNEL_OK")
</pallas_src>

<mosaic_0001>
module attributes {stable_mosaic.version = 11 : i64} {
  func.func @_fused_kernel(%arg0: i32, %arg1: memref<1x16x32xf32, #tpu.memory_space<vmem>>, %arg2: memref<8x32xf32, #tpu.memory_space<vmem>>, %arg3: memref<32x8xf32, #tpu.memory_space<vmem>>, %arg4: memref<3xf32, #tpu.memory_space<smem>>, %arg5: memref<5x32xf32, #tpu.memory_space<vmem>>, %arg6: memref<32x128xf32, #tpu.memory_space<vmem>>, %arg7: memref<1x128xf32, #tpu.memory_space<vmem>>, %arg8: memref<128x32xf32, #tpu.memory_space<vmem>>, %arg9: memref<1x16x32xf32, #tpu.memory_space<vmem>>) attributes {dimension_semantics = [#tpu.dimension_semantics<parallel>], iteration_bounds = array<i64: 2>, scalar_prefetch = 0 : i64, scratch_operands = 0 : i64, tpu.core_type = #tpu.core_type<tc>, window_params = [{transform_indices = @transform_0, window_bounds = array<i64: 1, 16, 32>}, {pipeline_mode = #tpu.pipeline_mode<synchronous>, transform_indices = @transform_1, window_bounds = array<i64: 8, 32>}, {pipeline_mode = #tpu.pipeline_mode<synchronous>, transform_indices = @transform_2, window_bounds = array<i64: 32, 8>}, {transform_indices = @transform_3, window_bounds = array<i64: 3>}, {pipeline_mode = #tpu.pipeline_mode<synchronous>, transform_indices = @transform_4, window_bounds = array<i64: 5, 32>}, {pipeline_mode = #tpu.pipeline_mode<synchronous>, transform_indices = @transform_5, window_bounds = array<i64: 32, 128>}, {pipeline_mode = #tpu.pipeline_mode<synchronous>, transform_indices = @transform_6, window_bounds = array<i64: 1, 128>}, {pipeline_mode = #tpu.pipeline_mode<synchronous>, transform_indices = @transform_7, window_bounds = array<i64: 128, 32>}, {transform_indices = @transform_8, window_bounds = array<i64: 1, 16, 32>}]} {
    %c0 = arith.constant 0 : index
    %c0_0 = arith.constant 0 : index
    %0 = vector.load %arg2[%c0, %c0_0] : memref<8x32xf32, #tpu.memory_space<vmem>>, vector<8x32xf32>
    %c0_1 = arith.constant 0 : index
    %c0_2 = arith.constant 0 : index
    %1 = vector.load %arg3[%c0_1, %c0_2] : memref<32x8xf32, #tpu.memory_space<vmem>>, vector<32x8xf32>
    %c0_3 = arith.constant 0 : index
    %c0_4 = arith.constant 0 : index
    %c0_5 = arith.constant 0 : index
    %2 = vector.load %arg1[%c0_3, %c0_4, %c0_5] : memref<1x16x32xf32, #tpu.memory_space<vmem>>, vector<1x16x32xf32>
    %3 = vector.shape_cast %2 : vector<1x16x32xf32> to vector<16x32xf32>
    %4 = vector.extract_strided_slice %3 {offsets = [0, 0], sizes = [16, 16], strides = [1, 1]} : vector<16x32xf32> to vector<16x16xf32>
    %5 = vector.extract_strided_slice %3 {offsets = [0, 16], sizes = [16, 16], strides = [1, 1]} : vector<16x32xf32> to vector<16x16xf32>
    %cst = arith.constant dense<0xFF800000> : vector<16xf32>
    %6 = vector.multi_reduction <maximumf>, %4, %cst [1] : vector<16x16xf32> to vector<16xf32>
    %7 = vector.shape_cast %6 : vector<16xf32> to vector<16x1xf32>
    %cst_6 = arith.constant dense<0xFF800000> : vector<16xf32>
    %8 = vector.multi_reduction <maximumf>, %5, %cst_6 [1] : vector<16x16xf32> to vector<16xf32>
    %9 = vector.shape_cast %8 : vector<16xf32> to vector<16x1xf32>
    %10 = tpu.concatenate %7, %9 in 0 : vector<16x1xf32>, vector<16x1xf32> -> vector<32x1xf32>
    %cst_7 = arith.constant dense<0.000000e+00> : vector<16xf32>
    %11 = vector.multi_reduction <add>, %4, %cst_7 [1] : vector<16x16xf32> to vector<16xf32>
    %12 = vector.shape_cast %11 : vector<16xf32> to vector<16x1xf32>
    %cst_8 = arith.constant 1.600000e+01 : f32
    %13 = vector.broadcast %cst_8 : f32 to vector<16x1xf32>
    %14 = arith.divf %12, %13 : vector<16x1xf32>
    %cst_9 = arith.constant dense<0.000000e+00> : vector<16xf32>
    %15 = vector.multi_reduction <add>, %5, %cst_9 [1] : vector<16x16xf32> to vector<16xf32>
    %16 = vector.shape_cast %15 : vector<16xf32> to vector<16x1xf32>
    %cst_10 = arith.constant 1.600000e+01 : f32
    %17 = vector.broadcast %cst_10 : f32 to vector<16x1xf32>
    %18 = arith.divf %16, %17 : vector<16x1xf32>
    %19 = tpu.concatenate %14, %18 in 0 : vector<16x1xf32>, vector<16x1xf32> -> vector<32x1xf32>
    %20 = tpu.concatenate %10, %19 in 1 : vector<32x1xf32>, vector<32x1xf32> -> vector<32x2xf32>
    %cst_11 = arith.constant dense<0.000000e+00> : vector<8x2xf32>
    %21 = tpu.matmul %0, %20, %cst_11 {dimension_numbers = #tpu.dot_dimension_numbers<[1], [0], [0], [1], [0, 0, 1, 1], [], []>} : vector<8x32xf32>, vector<32x2xf32>, vector<8x2xf32> -> vector<8x2xf32>
    %cst_12 = arith.constant 0.000000e+00 : f32
    %22 = vector.broadcast %cst_12 : f32 to vector<8x2xf32>
    %23 = arith.maximumf %21, %22 : vector<8x2xf32>
    %cst_13 = arith.constant dense<0.000000e+00> : vector<32x2xf32>
    %24 = tpu.matmul %1, %23, %cst_13 {dimension_numbers = #tpu.dot_dimension_numbers<[1], [0], [0], [1], [0, 0, 1, 1], [], []>} : vector<32x8xf32>, vector<8x2xf32>, vector<32x2xf32> -> vector<32x2xf32>
    %c0_14 = arith.constant 0 : index
    %25 = memref.load %arg4[%c0_14] : memref<3xf32, #tpu.memory_space<smem>>
    %c1 = arith.constant 1 : index
    %26 = memref.load %arg4[%c1] : memref<3xf32, #tpu.memory_space<smem>>
    %c2 = arith.constant 2 : index
    %27 = memref.load %arg4[%c2] : memref<3xf32, #tpu.memory_space<smem>>
    %c0_15 = arith.constant 0 : index
    %c0_16 = arith.constant 0 : index
    %28 = vector.load %arg5[%c0_15, %c0_16] : memref<5x32xf32, #tpu.memory_space<vmem>>, vector<1x32xf32>
    %c1_17 = arith.constant 1 : index
    %c0_18 = arith.constant 0 : index
    %29 = vector.load %arg5[%c1_17, %c0_18] : memref<5x32xf32, #tpu.memory_space<vmem>>, vector<1x32xf32>
    %c2_19 = arith.constant 2 : index
    %c0_20 = arith.constant 0 : index
    %30 = vector.load %arg5[%c2_19, %c0_20] : memref<5x32xf32, #tpu.memory_space<vmem>>, vector<1x32xf32>
    %c3 = arith.constant 3 : index
    %c0_21 = arith.constant 0 : index
    %31 = vector.load %arg5[%c3, %c0_21] : memref<5x32xf32, #tpu.memory_space<vmem>>, vector<1x32xf32>
    %c4 = arith.constant 4 : index
    %c0_22 = arith.constant 0 : index
    %32 = vector.load %arg5[%c4, %c0_22] : memref<5x32xf32, #tpu.memory_space<vmem>>, vector<1x32xf32>
    %33 = vector.extract_strided_slice %24 {offsets = [0, 0], sizes = [32, 1], strides = [1, 1]} : vector<32x2xf32> to vector<32x1xf32>
    %34 = vector.extract_strided_slice %24 {offsets = [0, 1], sizes = [32, 1], strides = [1, 1]} : vector<32x2xf32> to vector<32x1xf32>
    %35 = arith.addf %33, %34 : vector<32x1xf32>
    %36 = arith.negf %35 : vector<32x1xf32>
    %37 = math.exp %36 : vector<32x1xf32>
    %cst_23 = arith.constant 1.000000e+00 : f32
    %38 = vector.broadcast %cst_23 : f32 to vector<32x1xf32>
    %39 = arith.addf %38, %37 : vector<32x1xf32>
    %40 = arith.divf %38, %39 : vector<32x1xf32>
    %41 = vector.extract_strided_slice %40 {offsets = [0, 0], sizes = [16, 1], strides = [1, 1]} : vector<32x1xf32> to vector<16x1xf32>
    %42 = vector.broadcast %41 : vector<16x1xf32> to vector<16x16xf32>
    %43 = arith.mulf %4, %42 : vector<16x16xf32>
    %44 = vector.extract_strided_slice %40 {offsets = [16, 0], sizes = [16, 1], strides = [1, 1]} : vector<32x1xf32> to vector<16x1xf32>
    %45 = vector.broadcast %44 : vector<16x1xf32> to vector<16x16xf32>
    %46 = arith.mulf %5, %45 : vector<16x16xf32>
    %cst_24 = arith.constant dense<0xFF800000> : vector<16xf32>
    %47 = vector.multi_reduction <maximumf>, %43, %cst_24 [0] : vector<16x16xf32> to vector<16xf32>
    %48 = vector.shape_cast %47 : vector<16xf32> to vector<1x16xf32>
    %cst_25 = arith.constant dense<0.000000e+00> : vector<16xf32>
    %49 = vector.multi_reduction <add>, %43, %cst_25 [0] : vector<16x16xf32> to vector<16xf32>
    %50 = vector.shape_cast %49 : vector<16xf32> to vector<1x16xf32>
    %cst_26 = arith.constant dense<0xFF800000> : vector<16xf32>
    %51 = vector.multi_reduction <maximumf>, %46, %cst_26 [0] : vector<16x16xf32> to vector<16xf32>
    %52 = vector.shape_cast %51 : vector<16xf32> to vector<1x16xf32>
    %53 = arith.maximumf %48, %52 : vector<1x16xf32>
    %cst_27 = arith.constant dense<0.000000e+00> : vector<16xf32>
    %54 = vector.multi_reduction <add>, %46, %cst_27 [0] : vector<16x16xf32> to vector<16xf32>
    %55 = vector.shape_cast %54 : vector<16xf32> to vector<1x16xf32>
    %56 = arith.addf %50, %55 : vector<1x16xf32>
    %cst_28 = arith.constant 3.125000e-02 : f32
    %57 = vector.broadcast %cst_28 : f32 to vector<1x16xf32>
    %58 = arith.mulf %56, %57 : vector<1x16xf32>
    %59 = vector.broadcast %25 : f32 to vector<1x16xf32>
    %60 = arith.mulf %59, %53 : vector<1x16xf32>
    %61 = vector.broadcast %26 : f32 to vector<1x16xf32>
    %62 = arith.mulf %61, %58 : vector<1x16xf32>
    %63 = arith.addf %60, %62 : vector<1x16xf32>
    %64 = vector.broadcast %27 : f32 to vector<1x16xf32>
    %65 = arith.addf %63, %64 : vector<1x16xf32>
    %66 = arith.negf %65 : vector<1x16xf32>
    %67 = math.exp %66 : vector<1x16xf32>
    %cst_29 = arith.constant 1.000000e+00 : f32
    %68 = vector.broadcast %cst_29 : f32 to vector<1x16xf32>
    %69 = arith.addf %68, %67 : vector<1x16xf32>
    %70 = arith.divf %68, %69 : vector<1x16xf32>
    %71 = vector.broadcast %70 : vector<1x16xf32> to vector<16x16xf32>
    %72 = arith.mulf %43, %71 : vector<16x16xf32>
    %cst_30 = arith.constant 2.000000e+00 : f32
    %73 = vector.broadcast %cst_30 : f32 to vector<16x16xf32>
    %74 = arith.mulf %73, %4 : vector<16x16xf32>
    %75 = arith.addf %72, %74 : vector<16x16xf32>
    %76 = vector.broadcast %70 : vector<1x16xf32> to vector<16x16xf32>
    %77 = arith.mulf %46, %76 : vector<16x16xf32>
    %cst_31 = arith.constant 2.000000e+00 : f32
    %78 = vector.broadcast %cst_31 : f32 to vector<16x16xf32>
    %79 = arith.mulf %78, %5 : vector<16x16xf32>
    %80 = arith.addf %77, %79 : vector<16x16xf32>
    %81 = tpu.concatenate %75, %80 in 1 : vector<16x16xf32>, vector<16x16xf32> -> vector<16x32xf32>
    %cst_32 = arith.constant dense<0.000000e+00> : vector<16xf32>
    %82 = vector.multi_reduction <add>, %81, %cst_32 [1] : vector<16x32xf32> to vector<16xf32>
    %83 = vector.shape_cast %82 : vector<16xf32> to vector<16x1xf32>
    %cst_33 = arith.constant 3.200000e+01 : f32
    %84 = vector.broadcast %cst_33 : f32 to vector<16x1xf32>
    %85 = arith.divf %83, %84 : vector<16x1xf32>
    %86 = vector.broadcast %85 : vector<16x1xf32> to vector<16x32xf32>
    %87 = arith.subf %81, %86 : vector<16x32xf32>
    %88 = arith.mulf %87, %87 : vector<16x32xf32>
    %cst_34 = arith.constant dense<0.000000e+00> : vector<16xf32>
    %89 = vector.multi_reduction <add>, %88, %cst_34 [1] : vector<16x32xf32> to vector<16xf32>
    %90 = vector.shape_cast %89 : vector<16xf32> to vector<16x1xf32>
    %cst_35 = arith.constant 3.200000e+01 : f32
    %91 = vector.broadcast %cst_35 : f32 to vector<16x1xf32>
    %92 = arith.divf %90, %91 : vector<16x1xf32>
    %93 = vector.broadcast %85 : vector<16x1xf32> to vector<16x32xf32>
    %94 = arith.subf %81, %93 : vector<16x32xf32>
    %cst_36 = arith.constant 9.99999974E-6 : f32
    %95 = vector.broadcast %cst_36 : f32 to vector<16x1xf32>
    %96 = arith.addf %92, %95 : vector<16x1xf32>
    %97 = math.rsqrt %96 : vector<16x1xf32>
    %98 = vector.broadcast %97 : vector<16x1xf32> to vector<16x32xf32>
    %99 = arith.mulf %94, %98 : vector<16x32xf32>
    %100 = vector.broadcast %28 : vector<1x32xf32> to vector<16x32xf32>
    %101 = arith.mulf %99, %100 : vector<16x32xf32>
    %102 = vector.broadcast %29 : vector<1x32xf32> to vector<16x32xf32>
    %103 = arith.addf %101, %102 : vector<16x32xf32>
    %c0_37 = arith.constant 0 : index
    %c0_38 = arith.constant 0 : index
    %104 = vector.load %arg6[%c0_37, %c0_38] : memref<32x128xf32, #tpu.memory_space<vmem>>, vector<32x128xf32>
    %cst_39 = arith.constant dense<0.000000e+00> : vector<16x128xf32>
    %105 = tpu.matmul %103, %104, %cst_39 {dimension_numbers = #tpu.dot_dimension_numbers<[1], [0], [0], [1], [0, 0, 1, 1], [], []>} : vector<16x32xf32>, vector<32x128xf32>, vector<16x128xf32> -> vector<16x128xf32>
    %c0_40 = arith.constant 0 : index
    %c0_41 = arith.constant 0 : index
    %106 = vector.load %arg7[%c0_40, %c0_41] : memref<1x128xf32, #tpu.memory_space<vmem>>, vector<1x128xf32>
    %107 = vector.broadcast %106 : vector<1x128xf32> to vector<16x128xf32>
    %108 = arith.addf %105, %107 : vector<16x128xf32>
    %109 = math.tanh %108 : vector<16x128xf32>
    %c0_42 = arith.constant 0 : index
    %c0_43 = arith.constant 0 : index
    %110 = vector.load %arg8[%c0_42, %c0_43] : memref<128x32xf32, #tpu.memory_space<vmem>>, vector<128x32xf32>
    %cst_44 = arith.constant dense<0.000000e+00> : vector<16x32xf32>
    %111 = tpu.matmul %109, %110, %cst_44 {dimension_numbers = #tpu.dot_dimension_numbers<[1], [0], [0], [1], [0, 0, 1, 1], [], []>} : vector<16x128xf32>, vector<128x32xf32>, vector<16x32xf32> -> vector<16x32xf32>
    %112 = vector.broadcast %32 : vector<1x32xf32> to vector<16x32xf32>
    %113 = arith.addf %111, %112 : vector<16x32xf32>
    %114 = arith.addf %113, %103 : vector<16x32xf32>
    %cst_45 = arith.constant dense<0.000000e+00> : vector<16xf32>
    %115 = vector.multi_reduction <add>, %114, %cst_45 [1] : vector<16x32xf32> to vector<16xf32>
    %116 = vector.shape_cast %115 : vector<16xf32> to vector<16x1xf32>
    %cst_46 = arith.constant 3.200000e+01 : f32
    %117 = vector.broadcast %cst_46 : f32 to vector<16x1xf32>
    %118 = arith.divf %116, %117 : vector<16x1xf32>
    %119 = vector.broadcast %118 : vector<16x1xf32> to vector<16x32xf32>
    %120 = arith.subf %114, %119 : vector<16x32xf32>
    %121 = arith.mulf %120, %120 : vector<16x32xf32>
    %cst_47 = arith.constant dense<0.000000e+00> : vector<16xf32>
    %122 = vector.multi_reduction <add>, %121, %cst_47 [1] : vector<16x32xf32> to vector<16xf32>
    %123 = vector.shape_cast %122 : vector<16xf32> to vector<16x1xf32>
    %cst_48 = arith.constant 3.200000e+01 : f32
    %124 = vector.broadcast %cst_48 : f32 to vector<16x1xf32>
    %125 = arith.divf %123, %124 : vector<16x1xf32>
    %126 = vector.broadcast %118 : vector<16x1xf32> to vector<16x32xf32>
    %127 = arith.subf %114, %126 : vector<16x32xf32>
    %cst_49 = arith.constant 9.99999974E-6 : f32
    %128 = vector.broadcast %cst_49 : f32 to vector<16x1xf32>
    %129 = arith.addf %125, %128 : vector<16x1xf32>
    %130 = math.rsqrt %129 : vector<16x1xf32>
    %131 = vector.broadcast %130 : vector<16x1xf32> to vector<16x32xf32>
    %132 = arith.mulf %127, %131 : vector<16x32xf32>
    %133 = vector.broadcast %30 : vector<1x32xf32> to vector<16x32xf32>
    %134 = arith.mulf %132, %133 : vector<16x32xf32>
    %135 = vector.broadcast %31 : vector<1x32xf32> to vector<16x32xf32>
    %136 = arith.addf %134, %135 : vector<16x32xf32>
    %c0_50 = arith.constant 0 : index
    %c0_51 = arith.constant 0 : index
    %c0_52 = arith.constant 0 : index
    %137 = vector.load %arg9[%c0_50, %c0_51, %c0_52] : memref<1x16x32xf32, #tpu.memory_space<vmem>>, vector<1x16x32xf32>
    %138 = vector.shape_cast %137 : vector<1x16x32xf32> to vector<16x32xf32>
    %139 = vector.shape_cast %136 : vector<16x32xf32> to vector<1x16x32xf32>
    tpu.vector_store %arg9[%c0_50, %c0_51, %c0_52], %139 {strides = array<i32>} : memref<1x16x32xf32, #tpu.memory_space<vmem>>, vector<1x16x32xf32>,
    return
  }
  func.func @transform_0(%arg0: i32) -> (i32, i32, i32) {
    %c0_i32 = arith.constant 0 : i32
    %c0_i32_0 = arith.constant 0 : i32
    %c0_i32_1 = arith.constant 0 : i32
    return %arg0, %c0_i32, %c0_i32_0 : i32, i32, i32
  }
  func.func @transform_1(%arg0: i32) -> (i32, i32) {
    %c0_i32 = arith.constant 0 : i32
    %c0_i32_0 = arith.constant 0 : i32
    %c0_i32_1 = arith.constant 0 : i32
    return %c0_i32, %c0_i32_0 : i32, i32
  }
  func.func @transform_2(%arg0: i32) -> (i32, i32) {
    %c0_i32 = arith.constant 0 : i32
    %c0_i32_0 = arith.constant 0 : i32
    %c0_i32_1 = arith.constant 0 : i32
    return %c0_i32, %c0_i32_0 : i32, i32
  }
  func.func @transform_3(%arg0: i32) -> i32 {
    %c0_i32 = arith.constant 0 : i32
    %c0_i32_0 = arith.constant 0 : i32
    return %c0_i32 : i32
  }
  func.func @transform_4(%arg0: i32) -> (i32, i32) {
    %c0_i32 = arith.constant 0 : i32
    %c0_i32_0 = arith.constant 0 : i32
    %c0_i32_1 = arith.constant 0 : i32
    return %c0_i32, %c0_i32_0 : i32, i32
  }
  func.func @transform_5(%arg0: i32) -> (i32, i32) {
    %c0_i32 = arith.constant 0 : i32
    %c0_i32_0 = arith.constant 0 : i32
    %c0_i32_1 = arith.constant 0 : i32
    return %c0_i32, %c0_i32_0 : i32, i32
  }
  func.func @transform_6(%arg0: i32) -> (i32, i32) {
    %c0_i32 = arith.constant 0 : i32
    %c0_i32_0 = arith.constant 0 : i32
    %c0_i32_1 = arith.constant 0 : i32
    return %c0_i32, %c0_i32_0 : i32, i32
  }
  func.func @transform_7(%arg0: i32) -> (i32, i32) {
    %c0_i32 = arith.constant 0 : i32
    %c0_i32_0 = arith.constant 0 : i32
    %c0_i32_1 = arith.constant 0 : i32
    return %c0_i32, %c0_i32_0 : i32, i32
  }
  func.func @transform_8(%arg0: i32) -> (i32, i32, i32) {
    %c0_i32 = arith.constant 0 : i32
    %c0_i32_0 = arith.constant 0 : i32
    %c0_i32_1 = arith.constant 0 : i32
    return %arg0, %c0_i32, %c0_i32_0 : i32, i32, i32
  }
}

</mosaic_0001>

<llo_original>
// kernel: tpu_custom_call.1
$region0: #{tpu_custom_call.1}
  #allocation0 [shape = 'u32[]', space=smem, size = 0x4, offset = 0x4, fixed_abs, tag = 'smem constant byte address 0x4 - core index']
  #allocation1 [shape = 'u32[72,128]{1,0:T(1,128)}', space=vmem, size = 0x9000, scoped, tag = 'internal scratch']
  %s0 = inlined_call_operand.vmem [shape: f32[2,16,32], index: 0, kind: input, shape index: {}]
  %s1 = inlined_call_operand.vmem [shape: f32[8,32], index: 1, kind: input, shape index: {}]
  %s2 = inlined_call_operand.vmem [shape: f32[32,8], index: 2, kind: input, shape index: {}]
  %s3 = inlined_call_operand.vmem [shape: f32[3], index: 3, kind: input, shape index: {}]
  %s4 = inlined_call_operand.vmem [shape: f32[5,32], index: 4, kind: input, shape index: {}]
  %s5 = inlined_call_operand.vmem [shape: f32[32,128], index: 5, kind: input, shape index: {}]
  %s6 = inlined_call_operand.vmem [shape: f32[1,128], index: 6, kind: input, shape index: {}]
  %s7 = inlined_call_operand.vmem [shape: f32[128,32], index: 7, kind: input, shape index: {}]
  %s8 = inlined_call_operand.hbm [shape: f32[2,16,32], index: 8, kind: output, shape index: {}]
  %s9 = sld [smem:[#allocation0]]
  $region69: #{tpu_custom_call.1} parent=0
    _
  %s11 = ssub.s32 1, %s9
  %s12 = scalar_select 0, %s11, %s9
  $region1: #{tpu_custom_call.1} parent=0
    #allocation2 [shape = 'u8[512]{0}', space=smem, size = 0x200, scoped, tag = 'input window, operand 3, single buffered']
    #allocation3 [shape = 's32[2]{0}', space=sflag, size = 0x8, scoped, tag = 'scoped memory for tpu_custom_call.1']
    #allocation4 [shape = 's32[2]{0}', space=sflag, size = 0x8, scoped, tag = 'scoped memory for tpu_custom_call.1']
    #allocation5 [shape = 'u8[16384]{0}', space=vmem, size = 0x4000, scoped, tag = 'output window, operand 0']
    %13 = vsyncpa [#allocation4], 0
    %14 = vsyncpa [#allocation3], 0
    %s15 = scalar_lea.sflag [#allocation3], 1
    %16 = vsyncpa %s15, 0
    loop: start=0, step=1, limit=4
    $region2: #{tpu_custom_call.1} parent=1 // loop_pre_header
      _
    $region3: #{tpu_custom_call.1} parent=1 // loop_header
      %s18 = sphi 0, %s22
      %p19 = scmp.ge.s32.totalorder %s18, 4
      %s28 = sphi 0, %s30
      %s31 = sphi 0, %s28
      %s32 = sphi 0, %s31
      %s48 = sphi 0, %s32
      %s52 = sphi 0, %s52
      %s54 = sphi 0, %s52
      %s55 = sphi 0, %s54
      %s69 = sphi 0, %s55
      %s73 = sphi 0, %s73
      %s75 = sphi 0, %s73
      %s76 = sphi 0, %s75
      %s90 = sphi 0, %s76
      %s94 = sphi 0, %s94
      %s96 = sphi 0, %s94
      %s97 = sphi 0, %s96
      %s111 = sphi 0, %s97
      %s115 = sphi 0, %s115
      %s117 = sphi 0, %s115
      %s118 = sphi 0, %s117
      %s132 = sphi 0, %s118
      %s136 = sphi 0, %s136
      %s138 = sphi 0, %s136
      %s139 = sphi 0, %s138
      %s153 = sphi 0, %s139
      %s157 = sphi 0, %s157
      %s159 = sphi 0, %s157
      %s160 = sphi 0, %s159
      %s174 = sphi 0, %s160
      %s178 = sphi 0, %s178
      %s180 = sphi 0, %s178
      %s181 = sphi 0, %s180
      %s195 = sphi 0, %s181
      %s201 = sphi 0, %s203
      %s204 = sphi 0, %s201
      %s205 = sphi 0, %s204
      %s221 = sphi 0, %s205
    $region4: #{tpu_custom_call.1} parent=1 // loop_header_branch
      %21 = sbr.rel (%p19) target = $region8
    $region5: #{tpu_custom_call.1} parent=1 // loop_body
      %s23 = ssub.s32 %s18, 1
      %s24 = ssub.s32 %s18, 2
      %s25 = sadd.s32 %s18, 1
      %s26 = ssub.s32 %s18, %s25
      %p27 = scmp.eq.s32.totalorder %s26, 0
      %s29 = sadd.s32 %s28, 1
      %s30 = scalar_select %p27, %s28, %s29
      %p33 = pneg %p27
      %p34 = scmp.eq.s32.totalorder %s18, 1
      %p35 = por %p33, %p34
      %p36 = scmp.ne.s32.totalorder %s28, %s31
      %p37 = scmp.eq.s32.totalorder %s18, 0
      %p38 = por %p36, %p37
      %p39 = scmp.ne.s32.totalorder %s28, %s31
      %p40 = scmp.eq.s32.totalorder %s23, 1
      %p41 = por %p39, %p40
      %p42 = scmp.ne.s32.totalorder %s31, %s32
      %p43 = scmp.eq.s32.totalorder %s23, 0
      %p44 = por %p42, %p43
      %p45 = scmp.ne.s32.totalorder %s31, %s32
      %p46 = scmp.eq.s32.totalorder %s24, 1
      %p47 = por %p45, %p46
      %p49 = scmp.ne.s32.totalorder %s32, %s48
      %p50 = scmp.eq.s32.totalorder %s24, 0
      %p51 = por %p49, %p50
      %s53 = sadd.s32 %s52, 1
      %p56 = scmp.eq.s32.totalorder %s18, 1
      %p57 = scmp.ne.s32.totalorder %s52, %s54
      %p58 = scmp.eq.s32.totalorder %s18, 0
      %p59 = por %p57, %p58
      %p60 = scmp.ne.s32.totalorder %s52, %s54
      %p61 = scmp.eq.s32.totalorder %s23, 1
      %p62 = por %p60, %p61
      %p63 = scmp.ne.s32.totalorder %s54, %s55
      %p64 = scmp.eq.s32.totalorder %s23, 0
      %p65 = por %p63, %p64
      %p66 = scmp.ne.s32.totalorder %s54, %s55
      %p67 = scmp.eq.s32.totalorder %s24, 1
      %p68 = por %p66, %p67
      %p70 = scmp.ne.s32.totalorder %s55, %s69
      %p71 = scmp.eq.s32.totalorder %s24, 0
      %p72 = por %p70, %p71
      %s74 = sadd.s32 %s73, 1
      %p77 = scmp.eq.s32.totalorder %s18, 1
      %p78 = scmp.ne.s32.totalorder %s73, %s75
      %p79 = scmp.eq.s32.totalorder %s18, 0
      %p80 = por %p78, %p79
      %p81 = scmp.ne.s32.totalorder %s73, %s75
      %p82 = scmp.eq.s32.totalorder %s23, 1
      %p83 = por %p81, %p82
      %p84 = scmp.ne.s32.totalorder %s75, %s76
      %p85 = scmp.eq.s32.totalorder %s23, 0
      %p86 = por %p84, %p85
      %p87 = scmp.ne.s32.totalorder %s75, %s76
      %p88 = scmp.eq.s32.totalorder %s24, 1
      %p89 = por %p87, %p88
      %p91 = scmp.ne.s32.totalorder %s76, %s90
      %p92 = scmp.eq.s32.totalorder %s24, 0
      %p93 = por %p91, %p92
      %s95 = sadd.s32 %s94, 1
      %p98 = scmp.eq.s32.totalorder %s18, 1
      %p99 = scmp.ne.s32.totalorder %s94, %s96
      %p100 = scmp.eq.s32.totalorder %s18, 0
      %p101 = por %p99, %p100
      %p102 = scmp.ne.s32.totalorder %s94, %s96
      %p103 = scmp.eq.s32.totalorder %s23, 1
      %p104 = por %p102, %p103
      %p105 = scmp.ne.s32.totalorder %s96, %s97
      %p106 = scmp.eq.s32.totalorder %s23, 0
      %p107 = por %p105, %p106
      %p108 = scmp.ne.s32.totalorder %s96, %s97
      %p109 = scmp.eq.s32.totalorder %s24, 1
      %p110 = por %p108, %p109
      %p112 = scmp.ne.s32.totalorder %s97, %s111
      %p113 = scmp.eq.s32.totalorder %s24, 0
      %p114 = por %p112, %p113
      %s116 = sadd.s32 %s115, 1
      %p119 = scmp.eq.s32.totalorder %s18, 1
      %p120 = scmp.ne.s32.totalorder %s115, %s117
      %p121 = scmp.eq.s32.totalorder %s18, 0
      %p122 = por %p120, %p121
      %p123 = scmp.ne.s32.totalorder %s115, %s117
      %p124 = scmp.eq.s32.totalorder %s23, 1
      %p125 = por %p123, %p124
      %p126 = scmp.ne.s32.totalorder %s117, %s118
      %p127 = scmp.eq.s32.totalorder %s23, 0
      %p128 = por %p126, %p127
      %p129 = scmp.ne.s32.totalorder %s117, %s118
      %p130 = scmp.eq.s32.totalorder %s24, 1
      %p131 = por %p129, %p130
      %p133 = scmp.ne.s32.totalorder %s118, %s132
      %p134 = scmp.eq.s32.totalorder %s24, 0
      %p135 = por %p133, %p134
      %s137 = sadd.s32 %s136, 1
      %p140 = scmp.eq.s32.totalorder %s18, 1
      %p141 = scmp.ne.s32.totalorder %s136, %s138
      %p142 = scmp.eq.s32.totalorder %s18, 0
      %p143 = por %p141, %p142
      %p144 = scmp.ne.s32.totalorder %s136, %s138
      %p145 = scmp.eq.s32.totalorder %s23, 1
      %p146 = por %p144, %p145
      %p147 = scmp.ne.s32.totalorder %s138, %s139
      %p148 = scmp.eq.s32.totalorder %s23, 0
      %p149 = por %p147, %p148
      %p150 = scmp.ne.s32.totalorder %s138, %s139
      %p151 = scmp.eq.s32.totalorder %s24, 1
      %p152 = por %p150, %p151
      %p154 = scmp.ne.s32.totalorder %s139, %s153
      %p155 = scmp.eq.s32.totalorder %s24, 0
      %p156 = por %p154, %p155
      %s158 = sadd.s32 %s157, 1
      %p161 = scmp.eq.s32.totalorder %s18, 1
      %p162 = scmp.ne.s32.totalorder %s157, %s159
      %p163 = scmp.eq.s32.totalorder %s18, 0
      %p164 = por %p162, %p163
      %p165 = scmp.ne.s32.totalorder %s157, %s159
      %p166 = scmp.eq.s32.totalorder %s23, 1
      %p167 = por %p165, %p166
      %p168 = scmp.ne.s32.totalorder %s159, %s160
      %p169 = scmp.eq.s32.totalorder %s23, 0
      %p170 = por %p168, %p169
      %p171 = scmp.ne.s32.totalorder %s159, %s160
      %p172 = scmp.eq.s32.totalorder %s24, 1
      %p173 = por %p171, %p172
      %p175 = scmp.ne.s32.totalorder %s160, %s174
      %p176 = scmp.eq.s32.totalorder %s24, 0
      %p177 = por %p175, %p176
      %s179 = sadd.s32 %s178, 1
      %p182 = scmp.eq.s32.totalorder %s18, 1
      %p183 = scmp.ne.s32.totalorder %s178, %s180
      %p184 = scmp.eq.s32.totalorder %s18, 0
      %p185 = por %p183, %p184
      %p186 = scmp.ne.s32.totalorder %s178, %s180
      %p187 = scmp.eq.s32.totalorder %s23, 1
      %p188 = por %p186, %p187
      %p189 = scmp.ne.s32.totalorder %s180, %s181
      %p190 = scmp.eq.s32.totalorder %s23, 0
      %p191 = por %p189, %p190
      %p192 = scmp.ne.s32.totalorder %s180, %s181
      %p193 = scmp.eq.s32.totalorder %s24, 1
      %p194 = por %p192, %p193
      %p196 = scmp.ne.s32.totalorder %s181, %s195
      %p197 = scmp.eq.s32.totalorder %s24, 0
      %p198 = por %p196, %p197
      %s199 = ssub.s32 %s18, %s25
      %p200 = scmp.eq.s32.totalorder %s199, 0
      %s202 = sadd.s32 %s201, 1
      %s203 = scalar_select %p200, %s201, %s202
      %p206 = pneg %p200
      %p207 = scmp.eq.s32.totalorder %s18, 1
      %p208 = por %p206, %p207
      %p209 = scmp.ne.s32.totalorder %s201, %s204
      %p210 = scmp.eq.s32.totalorder %s18, 0
      %p211 = por %p209, %p210
      %p212 = scmp.ne.s32.totalorder %s201, %s204
      %p213 = scmp.eq.s32.totalorder %s23, 1
      %p214 = por %p212, %p213
      %p215 = scmp.ne.s32.totalorder %s204, %s205
      %p216 = scmp.eq.s32.totalorder %s23, 0
      %p217 = por %p215, %p216
      %p218 = scmp.ne.s32.totalorder %s204, %s205
      %p219 = scmp.eq.s32.totalorder %s24, 1
      %p220 = por %p218, %p219
      %p222 = scmp.ne.s32.totalorder %s205, %s221
      %p223 = scmp.eq.s32.totalorder %s24, 0
      %p224 = por %p222, %p223
      %p225 = scmp.le.s32.totalorder 1, %s18
      %p226 = scmp.lt.s32.totalorder %s18, 3
      %p227 = pnand %p225, %p226
      %p228 = pneg %p227
      // Predicated region
      $region9: #{tpu_custom_call.1} parent=5 // pred_check
        _
      $region10: #{tpu_custom_call.1} parent=5 // pred_check_branch
        %230 = sbr.rel (%p227) target = $region12
      $region11: #{tpu_custom_call.1} parent=5 // pred_region
        %s231 = ssub.s32 %s18, 1
        // Predicated region
        $region13: #{tpu_custom_call.1} parent=11 // pred_check
          %p232 = pneg %p65
        $region14: #{tpu_custom_call.1} parent=11 // pred_check_branch
          %234 = sbr.rel (%p232) target = $region16
        $region15: #{tpu_custom_call.1} parent=11 // pred_region
          _
        $region16: #{tpu_custom_call.1} parent=11 // pred_fallthru
          _
        // Predicated region
        $region17: #{tpu_custom_call.1} parent=11 // pred_check
          %p235 = pneg %p86
        $region18: #{tpu_custom_call.1} parent=11 // pred_check_branch
          %237 = sbr.rel (%p235) target = $region20
        $region19: #{tpu_custom_call.1} parent=11 // pred_region
          _
        $region20: #{tpu_custom_call.1} parent=11 // pred_fallthru
          _
        // Predicated region
        $region21: #{tpu_custom_call.1} parent=11 // pred_check
          %p238 = pneg %p107
        $region22: #{tpu_custom_call.1} parent=11 // pred_check_branch
          %240 = sbr.rel (%p238) target = $region24
        $region23: #{tpu_custom_call.1} parent=11 // pred_region
          %242 = vsyncadd [#allocation4], 0
          %s244 = sshll.u32 %s3, 4
          %s245 = int_to_ptr.vmem [resolvable:$true] %s244
          %247 = dma.vmem_to_smem %s245, 16, [#allocation2], [#allocation4]
        $region24: #{tpu_custom_call.1} parent=11 // pred_fallthru
          _
        // Predicated region
        $region25: #{tpu_custom_call.1} parent=11 // pred_check
          %p248 = pneg %p128
        $region26: #{tpu_custom_call.1} parent=11 // pred_check_branch
          %250 = sbr.rel (%p248) target = $region28
        $region27: #{tpu_custom_call.1} parent=11 // pred_region
          _
        $region28: #{tpu_custom_call.1} parent=11 // pred_fallthru
          _
        // Predicated region
        $region29: #{tpu_custom_call.1} parent=11 // pred_check
          %p251 = pneg %p149
        $region30: #{tpu_custom_call.1} parent=11 // pred_check_branch
          %253 = sbr.rel (%p251) target = $region32
        $region31: #{tpu_custom_call.1} parent=11 // pred_region
          _
        $region32: #{tpu_custom_call.1} parent=11 // pred_fallthru
          _
        // Predicated region
        $region33: #{tpu_custom_call.1} parent=11 // pred_check
          %p254 = pneg %p170
        $region34: #{tpu_custom_call.1} parent=11 // pred_check_branch
          %256 = sbr.rel (%p254) target = $region36
        $region35: #{tpu_custom_call.1} parent=11 // pred_region
          _
        $region36: #{tpu_custom_call.1} parent=11 // pred_fallthru
          _
        // Predicated region
        $region37: #{tpu_custom_call.1} parent=11 // pred_check
          %p257 = pneg %p191
        $region38: #{tpu_custom_call.1} parent=11 // pred_check_branch
          %259 = sbr.rel (%p257) target = $region40
        $region39: #{tpu_custom_call.1} parent=11 // pred_region
          _
        $region40: #{tpu_custom_call.1} parent=11 // pred_fallthru
          _
      $region12: #{tpu_custom_call.1} parent=5 // pred_fallthru
        _
      %p260 = scmp.lt.s32.totalorder %s18, 2
      // Predicated region
      $region41: #{tpu_custom_call.1} parent=5 // pred_check
        %p261 = pneg %p260
      $region42: #{tpu_custom_call.1} parent=5 // pred_check_branch
        %263 = sbr.rel (%p261) target = $region44
      $region43: #{tpu_custom_call.1} parent=5 // pred_region
        // Predicated region
        $region45: #{tpu_custom_call.1} parent=43 // pred_check
          %p264 = pneg %p38
        $region46: #{tpu_custom_call.1} parent=43 // pred_check_branch
          %266 = sbr.rel (%p264) target = $region48
        $region47: #{tpu_custom_call.1} parent=43 // pred_region
          %p267 = scmp.lt.s32.totalorder %s18, 1
          %s268 = scalar_select %p267, %s18, 1
          %s269 = smul.addr %s268, 2
          %s270 = smul.addr %s269, 8
          %s271 = scalar_lea.vmem %s0, %s270
        $region48: #{tpu_custom_call.1} parent=43 // pred_fallthru
          _
      $region44: #{tpu_custom_call.1} parent=5 // pred_fallthru
        _
      %p272 = scmp.le.s32.totalorder 1, %s18
      %p273 = scmp.lt.s32.totalorder %s18, 3
      %p274 = pnand %p272, %p273
      %p275 = pneg %p274
      // Predicated region
      $region49: #{tpu_custom_call.1} parent=5 // pred_check
        _
      $region50: #{tpu_custom_call.1} parent=5 // pred_check_branch
        %277 = sbr.rel (%p274) target = $region52
      $region51: #{tpu_custom_call.1} parent=5 // pred_region
        %s278 = ssub.s32 %s18, 1
        // Predicated region
        $region53: #{tpu_custom_call.1} parent=51 // pred_check
          %p279 = pneg %p107
        $region54: #{tpu_custom_call.1} parent=51 // pred_check_branch
          %281 = sbr.rel (%p279) target = $region56
        $region55: #{tpu_custom_call.1} parent=51 // pred_region
          %283 = dma.done [#allocation4], 16
        $region56: #{tpu_custom_call.1} parent=51 // pred_fallthru
          _
        %284 = sfence
        %p285 = scmp.lt.s32.totalorder %s23, 1
        %s286 = scalar_select %p285, %s23, 1
        %s287 = smul.addr %s286, 2
        %s288 = smul.addr %s287, 8
        %s289 = scalar_lea.vmem %s0, %s288
        %p290 = pneg %p44
        %p291 = pneg %p41
        %p292 = pneg %p65
        %p293 = pneg %p62
        %p294 = pneg %p86
        %p295 = pneg %p83
        %p296 = pneg %p107
        %p297 = pneg %p104
        %p298 = pneg %p128
        %p299 = pneg %p125
        %p300 = pneg %p149
        %p301 = pneg %p146
        %p302 = pneg %p170
        %p303 = pneg %p167
        %p304 = pneg %p191
        %p305 = pneg %p188
        %p306 = pneg %p217
        %p307 = pneg %p214
        %s308 = sand.u32 %s204, 1
        %s309 = scalar_lea.sflag [#allocation3], %s308
        %s310 = sand.u32 %s204, 1
        %s311 = smul.addr %s310, 16
        %s312 = scalar_lea.vmem [#allocation5], %s311
        %p313 = scmp.lt.s32.totalorder %s23, 1
        %s314 = scalar_select %p313, %s23, 1
        %s315 = smul.addr %s314, 2
        %s316 = smul.addr %s315, 8
        %s317 = scalar_lea.vmem %s0, %s316
        %v318 = vld [vmem:[%s1] sm:$0xff]
        %v319 = vld [vmem:[%s2] sm:$0xff]
        %v320 = vld [vmem:[%s2 + $0x8] sm:$0xff]
        %v321 = vld [vmem:[%s2 + $0x10] sm:$0xff]
        %v322 = vld [vmem:[%s2 + $0x18] sm:$0xff]
        %v323 = vld [vmem:[%s317] sm:$0xff]
        %v324 = vld [vmem:[%s317 + $0x8] sm:$0xff]
        %vm325 = vcmask 130048
        %v326 = vsel %vm325, %v323, -inf
        %327 = vmax.xlane.f32.xlu0 %v326
        %v328 = vpop.xlane.xlu0 %327
        %v329 = vsel %vm325, %v324, -inf
        %330 = vmax.xlane.f32.xlu0 %v329
        %v331 = vpop.xlane.xlu0 %330
        %vm332 = vcmask 261248
        %v333 = vsel %vm332, %v323, -inf
        %334 = vmax.xlane.f32.xlu0 %v333
        %v335 = vpop.xlane.xlu0 %334
        %v336 = vsel %vm332, %v324, -inf
        %337 = vmax.xlane.f32.xlu0 %v336
        %v338 = vpop.xlane.xlu0 %337
        %v339 = vsel %vm325, %v323, 0.0
        %340 = vadd.xlane.f32.xlu0 %v339
        %v341 = vpop.xlane.xlu0 %340
        %v342 = vsel %vm325, %v324, 0.0
        %343 = vadd.xlane.f32.xlu0 %v342
        %v344 = vpop.xlane.xlu0 %343
        %v345 = vrcp.pop 16.0
        %v346 = vmul.f32 16.0, %v345
        %v347 = vsub.f32 1.0, %v346
        %v348 = vmul.f32 %v345, %v347
        %v349 = vadd.f32 %v345, %v348
        %vm350 = vweird.f32 %v345
        %v351 = vsel %vm350, %v345, %v349
        %v352 = vmul.f32 %v341, %v351
        %v353 = vmul.f32 %v344, %v351
        %356 = vrot.lane.b32.xlu0 %v323, 112
        %v357 = vpop.permute.xlu0 %356
        %358 = vrot.lane.b32.xlu0 %v324, 112
        %v359 = vpop.permute.xlu0 %358
        %v362 = vsel %vm325, %v357, 0.0
        %363 = vadd.xlane.f32.xlu0 %v362
        %v364 = vpop.xlane.xlu0 %363
        %v365 = vsel %vm325, %v359, 0.0
        %366 = vadd.xlane.f32.xlu0 %v365
        %v367 = vpop.xlane.xlu0 %366
        %v368 = vmul.f32 %v364, %v351
        %v369 = vmul.f32 %v367, %v351
        %374 = vrot.lane.b32.xlu0 %v352, 1
        %v375 = vpop.permute.xlu0 %374
        %376 = vrot.lane.b32.xlu0 %v353, 1
        %v377 = vpop.permute.xlu0 %376
        %378 = vrot.lane.b32.xlu0 %v368, 1
        %v379 = vpop.permute.xlu0 %378
        %380 = vrot.lane.b32.xlu0 %v369, 1
        %v381 = vpop.permute.xlu0 %380
        %vm386 = vcmask 7168
        %v387 = vsel %vm386, %v328, %v375
        %v388 = vsel %vm386, %v331, %v377
        %v389 = vsel %vm386, %v335, %v379
        %v390 = vsel %vm386, %v338, %v381
        %vm391 = vcmask 261120
        %v393 = vsel %vm391, %v318, 0
        %395 = vmatpush.msra.mxu0 0.0
        %396 = vmatpush.msra.mxu0 0.0
        %397 = vmatpush.msra.mxu0 0.0
        %398 = vmatpush.msra.mxu0 0.0
        %399 = vmatpush.msra.mxu0 0.0
        %400 = vmatpush.msra.mxu0 0.0
        %401 = vmatpush.msra.mxu0 0.0
        %402 = vmatpush.msra.mxu0 0.0
        %403 = vmatpush.msra.mxu0 0.0
        %404 = vmatpush.msra.mxu0 0.0
        %405 = vmatpush.msra.mxu0 0.0
        %406 = vmatpush.msra.mxu0 0.0
        %407 = vmatpush.msra.mxu0 %v390
        %408 = vmatpush.msra.mxu0 %v389
        %409 = vmatpush.msra.mxu0 %v388
        %410 = vmatpush.msra.mxu0 %v387
        %411 = vmatmul.f32.gmra.mxu0 %v393
        %v412 = vpop.f32.mrf.mxu0
        %v413 = vadd.f32 0.0, %v412
        %414 = vdwg.mxu0
        %v415 = vmax.f32 %v413, 0.0
        %vm416 = vcmask 64512
        %v418 = vsel %vm416, %v319, 0
        %v421 = vsel %vm416, %v320, 0
        %v424 = vsel %vm416, %v321, 0
        %v427 = vsel %vm416, %v322, 0
        %429 = vmatpush.msra.mxu0 0.0
        %430 = vmatpush.msra.mxu0 0.0
        %431 = vmatpush.msra.mxu0 0.0
        %432 = vmatpush.msra.mxu0 0.0
        %433 = vmatpush.msra.mxu0 0.0
        %434 = vmatpush.msra.mxu0 0.0
        %435 = vmatpush.msra.mxu0 0.0
        %436 = vmatpush.msra.mxu0 0.0
        %437 = vmatpush.msra.mxu0 0.0
        %438 = vmatpush.msra.mxu0 0.0
        %439 = vmatpush.msra.mxu0 0.0
        %440 = vmatpush.msra.mxu0 0.0
        %441 = vmatpush.msra.mxu0 0.0
        %442 = vmatpush.msra.mxu0 0.0
        %443 = vmatpush.msra.mxu0 0.0
        %444 = vmatpush.msra.mxu0 %v415
        %445 = vmatmul.f32.gmra.mxu0 %v418
        %v446 = vpop.f32.mrf.mxu0
        %v447 = vadd.f32 0.0, %v446
        %448 = vmatmul.f32.gmra.mxu0 %v421
        %v449 = vpop.f32.mrf.mxu0
        %v450 = vadd.f32 0.0, %v449
        %451 = vmatmul.f32.gmra.mxu0 %v424
        %v452 = vpop.f32.mrf.mxu0
        %v453 = vadd.f32 0.0, %v452
        %454 = vmatmul.f32.gmra.mxu0 %v427
        %v455 = vpop.f32.mrf.mxu0
        %v456 = vadd.f32 0.0, %v455
        %457 = vdwg.mxu0
        %s458 = sld [smem:[#allocation2]]
        %s459 = sld [smem:[#allocation2 + $0x1]]
        %s460 = sld [smem:[#allocation2 + $0x2]]
        %v461 = vld [vmem:[%s4] sm:$0x1]
        %v462 = vld [vmem:[%s4 + $0x1] sm:$0x1]
        %v463 = vld [vmem:[%s4 + $0x2] sm:$0x1]
        %v464 = vld [vmem:[%s4 + $0x3] sm:$0x1]
        %v465 = vld [vmem:[%s4 + $0x4] sm:$0x1]
        %470 = vrot.lane.b32.xlu0 %v447, 127
        %v471 = vpop.permute.xlu0 %470
        %472 = vrot.lane.b32.xlu0 %v450, 127
        %v473 = vpop.permute.xlu0 %472
        %474 = vrot.lane.b32.xlu0 %v453, 127
        %v475 = vpop.permute.xlu0 %474
        %476 = vrot.lane.b32.xlu0 %v456, 127
        %v477 = vpop.permute.xlu0 %476
        %v482 = vadd.f32 %v447, %v471
        %v483 = vadd.f32 %v450, %v473
        %v484 = vadd.f32 %v453, %v475
        %v485 = vadd.f32 %v456, %v477
        %v486 = vxor.u32 %v482, 2147483648
        %v487 = vxor.u32 %v483, 2147483648
        %v488 = vxor.u32 %v484, 2147483648
        %v489 = vxor.u32 %v485, 2147483648
        %v490 = vmul.f32 %v486, 1.442695
        %v491 = vpow.pop %v490
        %v492 = vmul.f32 %v487, 1.442695
        %v493 = vpow.pop %v492
        %v494 = vmul.f32 %v488, 1.442695
        %v495 = vpow.pop %v494
        %v496 = vmul.f32 %v489, 1.442695
        %v497 = vpow.pop %v496
        %v498 = vadd.f32 %v491, 1.0
        %v499 = vadd.f32 %v493, 1.0
        %v500 = vadd.f32 %v495, 1.0
        %v501 = vadd.f32 %v497, 1.0
        %v502 = vrcp.pop %v498
        %v503 = vmul.f32 %v498, %v502
        %v504 = vsub.f32 1.0, %v503
        %v505 = vmul.f32 %v502, %v504
        %v506 = vadd.f32 %v502, %v505
        %vm507 = vweird.f32 %v498
        %vm508 = vweird.f32 %v502
        %vm509 = vmor %vm507, %vm508
        %v510 = vsel %vm509, %v502, %v506
        %v511 = vand.u32 2147483647, %v498
        %vm512 = vcmp.eq.f32.partialorder %v511, 8.507059e+37
        %v513 = vand.u32 %v498, 2147483648
        %v514 = vor.u32 1.1754944e-38, %v513
        %v515 = vsel %vm512, %v514, %v510
        %v516 = vmul.f32 1.0, %v515
        %v517 = vrcp.pop %v499
        %v518 = vmul.f32 %v499, %v517
        %v519 = vsub.f32 1.0, %v518
        %v520 = vmul.f32 %v517, %v519
        %v521 = vadd.f32 %v517, %v520
        %vm522 = vweird.f32 %v499
        %vm523 = vweird.f32 %v517
        %vm524 = vmor %vm522, %vm523
        %v525 = vsel %vm524, %v517, %v521
        %v526 = vand.u32 2147483647, %v499
        %vm527 = vcmp.eq.f32.partialorder %v526, 8.507059e+37
        %v528 = vand.u32 %v499, 2147483648
        %v529 = vor.u32 1.1754944e-38, %v528
        %v530 = vsel %vm527, %v529, %v525
        %v531 = vmul.f32 1.0, %v530
        %v532 = vrcp.pop %v500
        %v533 = vmul.f32 %v500, %v532
        %v534 = vsub.f32 1.0, %v533
        %v535 = vmul.f32 %v532, %v534
        %v536 = vadd.f32 %v532, %v535
        %vm537 = vweird.f32 %v500
        %vm538 = vweird.f32 %v532
        %vm539 = vmor %vm537, %vm538
        %v540 = vsel %vm539, %v532, %v536
        %v541 = vand.u32 2147483647, %v500
        %vm542 = vcmp.eq.f32.partialorder %v541, 8.507059e+37
        %v543 = vand.u32 %v500, 2147483648
        %v544 = vor.u32 1.1754944e-38, %v543
        %v545 = vsel %vm542, %v544, %v540
        %v546 = vmul.f32 1.0, %v545
        %v547 = vrcp.pop %v501
        %v548 = vmul.f32 %v501, %v547
        %v549 = vsub.f32 1.0, %v548
        %v550 = vmul.f32 %v547, %v549
        %v551 = vadd.f32 %v547, %v550
        %vm552 = vweird.f32 %v501
        %vm553 = vweird.f32 %v547
        %vm554 = vmor %vm552, %vm553
        %v555 = vsel %vm554, %v547, %v551
        %v556 = vand.u32 2147483647, %v501
        %vm557 = vcmp.eq.f32.partialorder %v556, 8.507059e+37
        %v558 = vand.u32 %v501, 2147483648
        %v559 = vor.u32 1.1754944e-38, %v558
        %v560 = vsel %vm557, %v559, %v555
        %v561 = vmul.f32 1.0, %v560
        %563 = vset.pattern.permute.xlu0 0
        %564 = vperm.xlu0 %563, %v516
        %v565 = vpop.permute.xlu0 %564
        %568 = vset.pattern.permute.xlu0 0
        %569 = vperm.xlu0 %568, %v531
        %v570 = vpop.permute.xlu0 %569
        %v572 = vmul.f32 %v323, %v565
        %v573 = vmul.f32 %v324, %v570
        %575 = vset.pattern.permute.xlu0 0
        %576 = vperm.xlu0 %575, %v546
        %v577 = vpop.permute.xlu0 %576
        %580 = vset.pattern.permute.xlu0 0
        %581 = vperm.xlu0 %580, %v561
        %v582 = vpop.permute.xlu0 %581
        %v584 = vmul.f32 %v323, %v577
        %v585 = vmul.f32 %v324, %v582
        %v586 = vsel %vm325, %v572, -inf
        %v587 = vsel %vm325, %v573, -inf
        %v588 = vmax.f32 %v586, %v587
        %v589 = vrot.slane %v588, 4
        %v590 = vmax.f32 %v588, %v589
        %v591 = vrot.slane %v590, 2
        %v592 = vmax.f32 %v590, %v591
        %v593 = vrot.slane %v592, 1
        %v594 = vmax.f32 %v592, %v593
        %v595 = vsel %vm325, %v572, 0.0
        %v596 = vsel %vm325, %v573, 0.0
        %v597 = vadd.f32 %v595, %v596
        %v598 = vrot.slane %v597, 4
        %v599 = vadd.f32 %v597, %v598
        %v600 = vrot.slane %v599, 2
        %v601 = vadd.f32 %v599, %v600
        %v602 = vrot.slane %v601, 1
        %v603 = vadd.f32 %v601, %v602
        %v604 = vsel %vm332, %v584, -inf
        %v605 = vsel %vm332, %v585, -inf
        %v606 = vmax.f32 %v604, %v605
        %v607 = vrot.slane %v606, 4
        %v608 = vmax.f32 %v606, %v607
        %v609 = vrot.slane %v608, 2
        %v610 = vmax.f32 %v608, %v609
        %v611 = vrot.slane %v610, 1
        %v612 = vmax.f32 %v610, %v611
        %614 = vrot.lane.b32.xlu0 %v612, 112
        %v615 = vpop.permute.xlu0 %614
        %v617 = vmax.f32 %v594, %v615
        %v618 = vsel %vm332, %v584, 0.0
        %v619 = vsel %vm332, %v585, 0.0
        %v620 = vadd.f32 %v618, %v619
        %v621 = vrot.slane %v620, 4
        %v622 = vadd.f32 %v620, %v621
        %v623 = vrot.slane %v622, 2
        %v624 = vadd.f32 %v622, %v623
        %v625 = vrot.slane %v624, 1
        %v626 = vadd.f32 %v624, %v625
        %628 = vrot.lane.b32.xlu0 %v626, 112
        %v629 = vpop.permute.xlu0 %628
        %v631 = vadd.f32 %v603, %v629
        %v632 = vmul.f32 %v631, 0.03125
        %v633 = vstv %s458
        %v634 = vmul.f32 %v633, %v617
        %v635 = vstv %s459
        %v636 = vmul.f32 %v635, %v632
        %v637 = vadd.f32 %v634, %v636
        %v638 = vstv %s460
        %v639 = vadd.f32 %v637, %v638
        %v640 = vxor.u32 %v639, 2147483648
        %v641 = vmul.f32 %v640, 1.442695
        %v642 = vpow.pop %v641
        %v643 = vadd.f32 %v642, 1.0
        %v644 = vrcp.pop %v643
        %v645 = vmul.f32 %v643, %v644
        %v646 = vsub.f32 1.0, %v645
        %v647 = vmul.f32 %v644, %v646
        %v648 = vadd.f32 %v644, %v647
        %vm649 = vweird.f32 %v643
        %vm650 = vweird.f32 %v644
        %vm651 = vmor %vm649, %vm650
        %v652 = vsel %vm651, %v644, %v648
        %v653 = vand.u32 2147483647, %v643
        %vm654 = vcmp.eq.f32.partialorder %v653, 8.507059e+37
        %v655 = vand.u32 %v643, 2147483648
        %v656 = vor.u32 1.1754944e-38, %v655
        %v657 = vsel %vm654, %v656, %v652
        %v658 = vmul.f32 1.0, %v657
        %v659 = vperm.slane %v658, 0
        %v660 = vmul.f32 %v572, %v659
        %v661 = vmul.f32 %v573, %v659
        %v662 = vmul.f32 %v323, 2.0
        %v663 = vmul.f32 %v324, 2.0
        %v664 = vadd.f32 %v660, %v662
        %v665 = vadd.f32 %v661, %v663
        %667 = vrot.lane.b32.xlu0 %v659, 16
        %v668 = vpop.permute.xlu0 %667
        %v670 = vmul.f32 %v584, %v668
        %v671 = vmul.f32 %v585, %v668
        %v672 = vadd.f32 %v670, %v662
        %v673 = vadd.f32 %v671, %v663
        %v674 = vsel %vm325, %v664, %v672
        %v675 = vsel %vm325, %v665, %v673
        %v676 = vsel %vm391, %v674, 0.0
        %677 = vadd.xlane.f32.xlu0 %v676
        %v678 = vpop.xlane.xlu0 %677
        %v679 = vsel %vm391, %v675, 0.0
        %680 = vadd.xlane.f32.xlu0 %v679
        %v681 = vpop.xlane.xlu0 %680
        %v682 = vrcp.pop 32.0
        %v683 = vmul.f32 32.0, %v682
        %v684 = vsub.f32 1.0, %v683
        %v685 = vmul.f32 %v682, %v684
        %v686 = vadd.f32 %v682, %v685
        %vm687 = vweird.f32 %v682
        %v688 = vsel %vm687, %v682, %v686
        %v689 = vmul.f32 %v678, %v688
        %v690 = vmul.f32 %v681, %v688
        %v691 = vsub.f32 %v674, %v689
        %v692 = vsub.f32 %v675, %v690
        %v693 = vmul.f32 %v691, %v691
        %v694 = vmul.f32 %v692, %v692
        %v695 = vsel %vm391, %v693, 0.0
        %696 = vadd.xlane.f32.xlu0 %v695
        %v697 = vpop.xlane.xlu0 %696
        %v698 = vsel %vm391, %v694, 0.0
        %699 = vadd.xlane.f32.xlu0 %v698
        %v700 = vpop.xlane.xlu0 %699
        %v701 = vmul.f32 %v697, %v688
        %v702 = vmul.f32 %v700, %v688
        %v703 = vadd.f32 %v701, 1e-05
        %v704 = vadd.f32 %v702, 1e-05
        %v705 = vrsqrt.pop %v703
        %v706 = vmul.f32 %v705, %v703
        %v707 = vmul.f32 %v706, %v705
        %v708 = vmul.f32 0.5, %v707
        %v709 = vsub.f32 1.5, %v708
        %v710 = vmul.f32 %v705, %v709
        %vm711 = vweird.f32 %v703
        %vm712 = vweird.f32 %v705
        %vm713 = vmor %vm711, %vm712
        %v714 = vsel %vm713, %v705, %v710
        %v715 = vrsqrt.pop %v704
        %v716 = vmul.f32 %v715, %v704
        %v717 = vmul.f32 %v716, %v715
        %v718 = vmul.f32 0.5, %v717
        %v719 = vsub.f32 1.5, %v718
        %v720 = vmul.f32 %v715, %v719
        %vm721 = vweird.f32 %v704
        %vm722 = vweird.f32 %v715
        %vm723 = vmor %vm721, %vm722
        %v724 = vsel %vm723, %v715, %v720
        %v725 = vmul.f32 %v691, %v714
        %v726 = vmul.f32 %v692, %v724
        %v727 = vperm.slane %v461, 0
        %v728 = vmul.f32 %v725, %v727
        %v729 = vmul.f32 %v726, %v727
        %v730 = vperm.slane %v462, 0
        %v731 = vadd.f32 %v728, %v730
        %v732 = vadd.f32 %v729, %v730
        %v733 = vld [vmem:[%s5] sm:$0xff]
        %v734 = vld [vmem:[%s5 + $0x8] sm:$0xff]
        %v735 = vld [vmem:[%s5 + $0x10] sm:$0xff]
        %v736 = vld [vmem:[%s5 + $0x18] sm:$0xff]
        %v737 = vld [vmem:[%s6] sm:$0x1]
        %v739 = vperm.slane %v737, 0
        %v742 = vsel %vm391, %v731, 0
        %v745 = vsel %vm391, %v732, 0
        %747 = vmatpush.msra.mxu0 0.0
        %748 = vmatpush.msra.mxu0 0.0
        %749 = vmatpush.msra.mxu0 0.0
        %750 = vmatpush.msra.mxu0 0.0
        %751 = vmatpush.msra.mxu0 0.0
        %752 = vmatpush.msra.mxu0 0.0
        %753 = vmatpush.msra.mxu0 0.0
        %754 = vmatpush.msra.mxu0 0.0
        %755 = vmatpush.msra.mxu0 0.0
        %756 = vmatpush.msra.mxu0 0.0
        %757 = vmatpush.msra.mxu0 0.0
        %758 = vmatpush.msra.mxu0 0.0
        %759 = vmatpush.msra.mxu0 %v736
        %760 = vmatpush.msra.mxu0 %v735
        %761 = vmatpush.msra.mxu0 %v734
        %762 = vmatpush.msra.mxu0 %v733
        %763 = vmatmul.f32.gmra.mxu0 %v742
        %v764 = vpop.f32.mrf.mxu0
        %v765 = vadd.f32 %v739, %v764
        %766 = vmatmul.f32.gmra.mxu0 %v745
        %v767 = vpop.f32.mrf.mxu0
        %v768 = vadd.f32 %v739, %v767
        %769 = vdwg.mxu0
        %v770 = vtanh.pop %v765
        %v771 = vtanh.pop %v768
        %v772 = vld [vmem:[%s7] sm:$0xff]
        %v773 = vld [vmem:[%s7 + $0x8] sm:$0xff]
        %v774 = vld [vmem:[%s7 + $0x10] sm:$0xff]
        %v775 = vld [vmem:[%s7 + $0x18] sm:$0xff]
        %v776 = vld [vmem:[%s7 + $0x20] sm:$0xff]
        %v777 = vld [vmem:[%s7 + $0x28] sm:$0xff]
        %v778 = vld [vmem:[%s7 + $0x30] sm:$0xff]
        %v779 = vld [vmem:[%s7 + $0x38] sm:$0xff]
        %v780 = vld [vmem:[%s7 + $0x40] sm:$0xff]
        %v781 = vld [vmem:[%s7 + $0x48] sm:$0xff]
        %v782 = vld [vmem:[%s7 + $0x50] sm:$0xff]
        %v783 = vld [vmem:[%s7 + $0x58] sm:$0xff]
        %v784 = vld [vmem:[%s7 + $0x60] sm:$0xff]
        %v785 = vld [vmem:[%s7 + $0x68] sm:$0xff]
        %v786 = vld [vmem:[%s7 + $0x70] sm:$0xff]
        %v787 = vld [vmem:[%s7 + $0x78] sm:$0xff]
        %v788 = vperm.slane %v465, 0
        %789 = vmatpush.msra.mxu0 %v787
        %790 = vmatpush.msra.mxu0 %v786
        %791 = vmatpush.msra.mxu0 %v785
        %792 = vmatpush.msra.mxu0 %v784
        %793 = vmatpush.msra.mxu0 %v783
        %794 = vmatpush.msra.mxu0 %v782
        %795 = vmatpush.msra.mxu0 %v781
        %796 = vmatpush.msra.mxu0 %v780
        %797 = vmatpush.msra.mxu0 %v779
        %798 = vmatpush.msra.mxu0 %v778
        %799 = vmatpush.msra.mxu0 %v777
        %800 = vmatpush.msra.mxu0 %v776
        %801 = vmatpush.msra.mxu0 %v775
        %802 = vmatpush.msra.mxu0 %v774
        %803 = vmatpush.msra.mxu0 %v773
        %804 = vmatpush.msra.mxu0 %v772
        %805 = vmatmul.f32.gmra.mxu0 %v770
        %v806 = vpop.f32.mrf.mxu0
        %v807 = vadd.f32 %v788, %v806
        %808 = vmatmul.f32.gmra.mxu0 %v771
        %v809 = vpop.f32.mrf.mxu0
        %v810 = vadd.f32 %v788, %v809
        %811 = vdwg.mxu0
        %v812 = vadd.f32 %v807, %v731
        %v813 = vadd.f32 %v810, %v732
        %v814 = vsel %vm391, %v812, 0.0
        %815 = vadd.xlane.f32.xlu0 %v814
        %v816 = vpop.xlane.xlu0 %815
        %v817 = vsel %vm391, %v813, 0.0
        %818 = vadd.xlane.f32.xlu0 %v817
        %v819 = vpop.xlane.xlu0 %818
        %v820 = vmul.f32 %v816, %v688
        %v821 = vmul.f32 %v819, %v688
        %v822 = vsub.f32 %v812, %v820
        %v823 = vsub.f32 %v813, %v821
        %v824 = vmul.f32 %v822, %v822
        %v825 = vmul.f32 %v823, %v823
        %v826 = vsel %vm391, %v824, 0.0
        %827 = vadd.xlane.f32.xlu0 %v826
        %v828 = vpop.xlane.xlu0 %827
        %v829 = vsel %vm391, %v825, 0.0
        %830 = vadd.xlane.f32.xlu0 %v829
        %v831 = vpop.xlane.xlu0 %830
        %v832 = vmul.f32 %v828, %v688
        %v833 = vmul.f32 %v831, %v688
        %v834 = vadd.f32 %v832, 1e-05
        %v835 = vadd.f32 %v833, 1e-05
        %v836 = vrsqrt.pop %v834
        %v837 = vmul.f32 %v836, %v834
        %v838 = vmul.f32 %v837, %v836
        %v839 = vmul.f32 0.5, %v838
        %v840 = vsub.f32 1.5, %v839
        %v841 = vmul.f32 %v836, %v840
        %vm842 = vweird.f32 %v834
        %vm843 = vweird.f32 %v836
        %vm844 = vmor %vm842, %vm843
        %v845 = vsel %vm844, %v836, %v841
        %v846 = vrsqrt.pop %v835
        %v847 = vmul.f32 %v846, %v835
        %v848 = vmul.f32 %v847, %v846
        %v849 = vmul.f32 0.5, %v848
        %v850 = vsub.f32 1.5, %v849
        %v851 = vmul.f32 %v846, %v850
        %vm852 = vweird.f32 %v835
        %vm853 = vweird.f32 %v846
        %vm854 = vmor %vm852, %vm853
        %v855 = vsel %vm854, %v846, %v851
        %v856 = vmul.f32 %v822, %v845
        %v857 = vmul.f32 %v823, %v855
        %v858 = vperm.slane %v463, 0
        %v859 = vmul.f32 %v856, %v858
        %v860 = vmul.f32 %v857, %v858
        %v861 = vperm.slane %v464, 0
        %v862 = vadd.f32 %v859, %v861
        %v863 = vadd.f32 %v860, %v861
        %864 = vst.msk [vmem:[%s312] sm:$0xff] %vm391, %v862
        %865 = vst.msk [vmem:[%s312 + $0x8] sm:$0xff] %vm391, %v863
        %s866 = sand.u32 %s204, 1
        %s867 = scalar_lea.sflag [#allocation3], %s866
        %s868 = sand.u32 %s204, 1
        %s869 = smul.addr %s868, 16
        %s870 = scalar_lea.vmem [#allocation5], %s869
        // Predicated region
        $region57: #{tpu_custom_call.1} parent=51 // pred_check
          %p871 = pneg %p214
        $region58: #{tpu_custom_call.1} parent=51 // pred_check_branch
          %873 = sbr.rel (%p871) target = $region60
        $region59: #{tpu_custom_call.1} parent=51 // pred_region
          %875 = vsyncadd %s867, 0
          %s876 = smul.addr %s23, 2
          %s877 = smul.addr %s876, 8
          %s878 = scalar_lea.hbm %s8, %s877
          %s879 = sshll.u32 %s870, 4
          %s880 = int_to_ptr.vmem [resolvable:$true] %s879
          %s881 = sshll.u32 %s878, 4
          %s882 = int_to_ptr.hbm [resolvable:$true] %s881
          %887 = dma.vmem_to_hbm [thread:$0]  %s880, 256, %s882, %s867, 128, 128, 8
        $region60: #{tpu_custom_call.1} parent=51 // pred_fallthru
          _
      $region52: #{tpu_custom_call.1} parent=5 // pred_fallthru
        _
      %p888 = scmp.le.s32.totalorder 2, %s18
      // Predicated region
      $region61: #{tpu_custom_call.1} parent=5 // pred_check
        %p889 = pneg %p888
      $region62: #{tpu_custom_call.1} parent=5 // pred_check_branch
        %891 = sbr.rel (%p889) target = $region64
      $region63: #{tpu_custom_call.1} parent=5 // pred_region
        %s892 = ssub.s32 %s18, 2
        // Predicated region
        $region65: #{tpu_custom_call.1} parent=63 // pred_check
          %p893 = pneg %p220
        $region66: #{tpu_custom_call.1} parent=63 // pred_check_branch
          %895 = sbr.rel (%p893) target = $region68
        $region67: #{tpu_custom_call.1} parent=63 // pred_region
          %s896 = sand.u32 %s205, 1
          %s897 = scalar_lea.sflag [#allocation3], %s896
          %s898 = sand.u32 %s205, 1
          %s899 = smul.addr %s898, 16
          %s900 = scalar_lea.vmem [#allocation5], %s899
          %902 = dma.done %s897, 256
        $region68: #{tpu_custom_call.1} parent=63 // pred_fallthru
          _
      $region64: #{tpu_custom_call.1} parent=5 // pred_fallthru
        _
    $region6: #{tpu_custom_call.1} parent=1 // loop_footer
      %s22 = sadd.s32 1, %s18
    $region7: #{tpu_custom_call.1} parent=1 // loop_footer_branch
      %17 = sbr.rel target = $region3
    $region8: #{tpu_custom_call.1} parent=1 // loop_exit
      _
    %903 = vsyncpa [#allocation3], 1
    %s904 = scalar_lea.sflag [#allocation3], 1
    %905 = vsyncpa %s904, 1
    %906 = vsyncpa [#allocation4], 1
    %s907 = scalar_lea.sflag [#allocation4], 1
    %908 = vsyncpa %s907, 1

</llo_original>
